<compile_context>
chip_gen: v7x
topology: tpu7x:2x2x1
jax: 0.10.0
libtpu: 0.0.40
codegen_flags: <defaults>
</compile_context>

<pallas_src>
import jax
import jax.numpy as jnp
from jax.experimental import pallas as pl
from jax.experimental.pallas import tpu as pltpu

HIDDEN = 128          # hidden width per branch (torch: nn.Linear(*input_dims, 128))
OUT_PAD = 128         # lane-dense packed output width: [pi logits | v | zeros]
TILE_B = 256          # batch tile for the grid (only used when B > TILE_B)


def actor_critic_kernel(x_ref, wh_ref, bh_ref, wo_ref, bo_ref, out_ref):
    # x:(TB, D)  wh:(D, 2H)  bh:(1, 2H)  wo:(2H, OUT_PAD)  bo:(1, OUT_PAD)
    x = x_ref[...]

    # Fused actor+critic hidden layer: one MXU pass, one ReLU.
    h = jnp.dot(x, wh_ref[...], preferred_element_type=jnp.float32) + bh_ref[...]
    h = jnp.maximum(h, 0.0)

    # Fused block-diagonal head: pi in cols [0, A), v in col A, zeros after.
    out_ref[...] = (jnp.dot(h, wo_ref[...], preferred_element_type=jnp.float32)
                    + bo_ref[...])


def bake_params(p, out_pad=OUT_PAD):
    """One-time layout baking: transpose torch (out,in) weights, concat the
    two hidden branches, build the block-diagonal head, pad to lane width."""
    H = p["pi1_w"].shape[0]
    A = p["pi_w"].shape[0]
    assert A + 1 <= out_pad, "n_actions + 1 must fit in the packed output"

    w_hidden = jnp.concatenate([p["pi1_w"].T, p["v1_w"].T], axis=1)     # (D, 2H)
    b_hidden = jnp.concatenate([p["pi1_b"], p["v1_b"]]).reshape(1, 2 * H)

    w_head = jnp.zeros((2 * H, out_pad), jnp.float32)
    w_head = w_head.at[:H, :A].set(p["pi_w"].T)            # actor block
    w_head = w_head.at[H:, A:A + 1].set(p["v_w"].T)        # critic block
    b_head = jnp.zeros((1, out_pad), jnp.float32)
    b_head = b_head.at[0, :A].set(p["pi_b"])
    b_head = b_head.at[0, A].set(p["v_b"][0])

    return dict(w_hidden=w_hidden, b_hidden=b_hidden,
                w_head=w_head, b_head=b_head, n_actions=int(A))


def actor_critic_forward(x, baked, tile_b=TILE_B):
    """x: (B, input_dims) float32. baked: output of bake_params."""
    B, D = x.shape
    A = baked["n_actions"]
    two_h, out_pad = baked["w_head"].shape

    if B <= tile_b:
        tb, b_pad, xp = B, B, x                      # single block == full array
    else:
        tb = tile_b
        b_pad = ((B + tb - 1) // tb) * tb
        xp = jnp.pad(x, ((0, b_pad - B), (0, 0))) if b_pad != B else x

    out = pl.pallas_call(
        actor_critic_kernel,
        out_shape=jax.ShapeDtypeStruct((b_pad, out_pad), jnp.float32),
        grid_spec=pltpu.PrefetchScalarGridSpec(
            num_scalar_prefetch=0,
            grid=(b_pad // tb,),
            in_specs=[
                pl.BlockSpec((tb, D), lambda i: (i, 0)),          # x (tiled)
                pl.BlockSpec((D, two_h), lambda i: (0, 0)),       # fused hidden W
                pl.BlockSpec((1, two_h), lambda i: (0, 0)),       # fused hidden b
                pl.BlockSpec((two_h, out_pad), lambda i: (0, 0)), # block-diag head W
                pl.BlockSpec((1, out_pad), lambda i: (0, 0)),     # packed head b
            ],
            out_specs=pl.BlockSpec((tb, out_pad), lambda i: (i, 0)),
        ),
        compiler_params=pltpu.CompilerParams(
            dimension_semantics=("parallel",)),
    )(xp, baked["w_hidden"], baked["b_hidden"],
      baked["w_head"], baked["b_head"])

    pi = out[:B, :A]           # slice off lane padding before any softmax/loss
    v = out[:B, A:A + 1]
    return pi, v


def init_params(key, input_dims, n_actions, hidden=HIDDEN):
    """Deterministic init mimicking torch.nn.Linear default (uniform +-1/sqrt(fan_in))."""
    ks = jax.random.split(key, 8)

    def lin(kw, kb, fan_in, fan_out):
        bound = 1.0 / jnp.sqrt(jnp.float32(fan_in))
        w = jax.random.uniform(kw, (fan_out, fan_in), jnp.float32, -bound, bound)
        b = jax.random.uniform(kb, (fan_out,), jnp.float32, -bound, bound)
        return w, b

    pi1_w, pi1_b = lin(ks[0], ks[1], input_dims, hidden)
    v1_w, v1_b = lin(ks[2], ks[3], input_dims, hidden)
    pi_w, pi_b = lin(ks[4], ks[5], hidden, n_actions)
    v_w, v_b = lin(ks[6], ks[7], hidden, 1)
    return dict(pi1_w=pi1_w, pi1_b=pi1_b, v1_w=v1_w, v1_b=v1_b,
                pi_w=pi_w, pi_b=pi_b, v_w=v_w, v_b=v_b)


def reference_forward(x, p):
    h_pi = jnp.maximum(x @ p["pi1_w"].T + p["pi1_b"], 0.0)
    h_v = jnp.maximum(x @ p["v1_w"].T + p["v1_b"], 0.0)
    pi = h_pi @ p["pi_w"].T + p["pi_b"]
    v = h_v @ p["v_w"].T + p["v_b"]
    return pi, v


if __name__ == "__main__":
    # Small CartPole-like config: input_dims=(4,), n_actions=2, batch=8
    INPUT_DIMS = 4
    N_ACTIONS = 2
    BATCH = 8

    key = jax.random.PRNGKey(0)
    k_x, k_p = jax.random.split(key)

    x = jax.random.normal(k_x, (BATCH, INPUT_DIMS), dtype=jnp.float32)
    params = init_params(k_p, INPUT_DIMS, N_ACTIONS)
    baked = bake_params(params)                 # one-time layout baking

    pi, v = actor_critic_forward(x, baked)
    pi = jax.block_until_ready(pi)
    v = jax.block_until_ready(v)

    # Correctness check against pure-JAX reference of the torch forward.
    pi_ref, v_ref = reference_forward(x, params)
    assert pi.shape == (BATCH, N_ACTIONS)
    assert v.shape == (BATCH, 1)
    assert jnp.allclose(pi, pi_ref, atol=1e-5, rtol=1e-5)
    assert jnp.allclose(v, v_ref, atol=1e-5, rtol=1e-5)

    # TODO(synk): remember/calc_R/calc_loss/choose_action are host-side RL
    # bookkeeping / sampling, not part of the forward pass; left in JAX land.

    print("KERNEL_OK")
</pallas_src>

<mosaic_0001>
module attributes {stable_mosaic.version = 11 : i64} {
  func.func @actor_critic_kernel(%arg0: i32, %arg1: memref<8x4xf32, #tpu.memory_space<vmem>>, %arg2: memref<4x256xf32, #tpu.memory_space<vmem>>, %arg3: memref<1x256xf32, #tpu.memory_space<vmem>>, %arg4: memref<256x128xf32, #tpu.memory_space<vmem>>, %arg5: memref<1x128xf32, #tpu.memory_space<vmem>>, %arg6: memref<8x128xf32, #tpu.memory_space<vmem>>) attributes {dimension_semantics = [#tpu.dimension_semantics<parallel>], iteration_bounds = array<i64: 1>, scalar_prefetch = 0 : i64, scratch_operands = 0 : i64, tpu.core_type = #tpu.core_type<tc>, window_params = [{transform_indices = @transform_0, window_bounds = array<i64: 8, 4>}, {pipeline_mode = #tpu.pipeline_mode<synchronous>, transform_indices = @transform_1, window_bounds = array<i64: 4, 256>}, {pipeline_mode = #tpu.pipeline_mode<synchronous>, transform_indices = @transform_2, window_bounds = array<i64: 1, 256>}, {pipeline_mode = #tpu.pipeline_mode<synchronous>, transform_indices = @transform_3, window_bounds = array<i64: 256, 128>}, {pipeline_mode = #tpu.pipeline_mode<synchronous>, transform_indices = @transform_4, window_bounds = array<i64: 1, 128>}, {transform_indices = @transform_5, window_bounds = array<i64: 8, 128>}]} {
    %c0 = arith.constant 0 : index
    %c0_0 = arith.constant 0 : index
    %0 = vector.load %arg1[%c0, %c0_0] : memref<8x4xf32, #tpu.memory_space<vmem>>, vector<8x4xf32>
    %c0_1 = arith.constant 0 : index
    %c0_2 = arith.constant 0 : index
    %1 = vector.load %arg2[%c0_1, %c0_2] : memref<4x256xf32, #tpu.memory_space<vmem>>, vector<4x256xf32>
    %cst = arith.constant dense<0.000000e+00> : vector<8x256xf32>
    %2 = tpu.matmul %0, %1, %cst {dimension_numbers = #tpu.dot_dimension_numbers<[1], [0], [0], [1], [0, 0, 1, 1], [], []>} : vector<8x4xf32>, vector<4x256xf32>, vector<8x256xf32> -> vector<8x256xf32>
    %c0_3 = arith.constant 0 : index
    %c0_4 = arith.constant 0 : index
    %3 = vector.load %arg3[%c0_3, %c0_4] : memref<1x256xf32, #tpu.memory_space<vmem>>, vector<1x256xf32>
    %4 = vector.broadcast %3 : vector<1x256xf32> to vector<8x256xf32>
    %5 = arith.addf %2, %4 : vector<8x256xf32>
    %cst_5 = arith.constant 0.000000e+00 : f32
    %6 = vector.broadcast %cst_5 : f32 to vector<8x256xf32>
    %7 = arith.maximumf %5, %6 : vector<8x256xf32>
    %c0_6 = arith.constant 0 : index
    %c0_7 = arith.constant 0 : index
    %8 = vector.load %arg4[%c0_6, %c0_7] : memref<256x128xf32, #tpu.memory_space<vmem>>, vector<256x128xf32>
    %cst_8 = arith.constant dense<0.000000e+00> : vector<8x128xf32>
    %9 = tpu.matmul %7, %8, %cst_8 {dimension_numbers = #tpu.dot_dimension_numbers<[1], [0], [0], [1], [0, 0, 1, 1], [], []>} : vector<8x256xf32>, vector<256x128xf32>, vector<8x128xf32> -> vector<8x128xf32>
    %c0_9 = arith.constant 0 : index
    %c0_10 = arith.constant 0 : index
    %10 = vector.load %arg5[%c0_9, %c0_10] : memref<1x128xf32, #tpu.memory_space<vmem>>, vector<1x128xf32>
    %11 = vector.broadcast %10 : vector<1x128xf32> to vector<8x128xf32>
    %12 = arith.addf %9, %11 : vector<8x128xf32>
    %c0_11 = arith.constant 0 : index
    %c0_12 = arith.constant 0 : index
    %13 = vector.load %arg6[%c0_11, %c0_12] : memref<8x128xf32, #tpu.memory_space<vmem>>, vector<8x128xf32>
    tpu.vector_store %arg6[%c0_11, %c0_12], %12 {strides = array<i32>} : memref<8x128xf32, #tpu.memory_space<vmem>>, vector<8x128xf32>,
    return
  }
  func.func @transform_0(%arg0: i32) -> (i32, i32) {
    %c0_i32 = arith.constant 0 : i32
    %c0_i32_0 = arith.constant 0 : i32
    return %arg0, %c0_i32 : i32, i32
  }
  func.func @transform_1(%arg0: i32) -> (i32, i32) {
    %c0_i32 = arith.constant 0 : i32
    %c0_i32_0 = arith.constant 0 : i32
    %c0_i32_1 = arith.constant 0 : i32
    return %c0_i32, %c0_i32_0 : i32, i32
  }
  func.func @transform_2(%arg0: i32) -> (i32, i32) {
    %c0_i32 = arith.constant 0 : i32
    %c0_i32_0 = arith.constant 0 : i32
    %c0_i32_1 = arith.constant 0 : i32
    return %c0_i32, %c0_i32_0 : i32, i32
  }
  func.func @transform_3(%arg0: i32) -> (i32, i32) {
    %c0_i32 = arith.constant 0 : i32
    %c0_i32_0 = arith.constant 0 : i32
    %c0_i32_1 = arith.constant 0 : i32
    return %c0_i32, %c0_i32_0 : i32, i32
  }
  func.func @transform_4(%arg0: i32) -> (i32, i32) {
    %c0_i32 = arith.constant 0 : i32
    %c0_i32_0 = arith.constant 0 : i32
    %c0_i32_1 = arith.constant 0 : i32
    return %c0_i32, %c0_i32_0 : i32, i32
  }
  func.func @transform_5(%arg0: i32) -> (i32, i32) {
    %c0_i32 = arith.constant 0 : i32
    %c0_i32_0 = arith.constant 0 : i32
    return %arg0, %c0_i32 : i32, i32
  }
}

</mosaic_0001>

<llo_original>
// kernel: tpu_custom_call.1
$region0: #{tpu_custom_call.1}
  #allocation0 [shape = 'u32[]', space=smem, size = 0x4, offset = 0x4, fixed_abs, tag = 'smem constant byte address 0x4 - core index']
  #allocation1 [shape = 'u32[144,128]{1,0:T(1,128)}', space=vmem, size = 0x12000, scoped, tag = 'internal scratch']
  %s0 = inlined_call_operand.vmem [shape: f32[8,4], index: 0, kind: input, shape index: {}]
  %s1 = inlined_call_operand.vmem [shape: f32[4,256], index: 1, kind: input, shape index: {}]
  %s2 = inlined_call_operand.vmem [shape: f32[1,256], index: 2, kind: input, shape index: {}]
  %s3 = inlined_call_operand.hbm [shape: f32[256,128], index: 3, kind: input, shape index: {}]
  %s4 = inlined_call_operand.vmem [shape: f32[1,128], index: 4, kind: input, shape index: {}]
  %s5 = inlined_call_operand.hbm [shape: f32[8,128], index: 5, kind: output, shape index: {}]
  %s6 = sld [smem:[#allocation0]]
  $region34: #{tpu_custom_call.1} parent=0
    _
  %s8 = ssub.s32 1, %s6
  %s9 = scalar_select 0, %s8, %s6
  $region1: #{tpu_custom_call.1} parent=0
    #allocation2 [shape = 'u8[131072]{0}', space=vmem, size = 0x20000, scoped, tag = 'input window, operand 3, single buffered']
    #allocation3 [shape = 's32[1]{0}', space=sflag, size = 0x4, scoped, tag = 'scoped memory for tpu_custom_call.1']
    #allocation4 [shape = 's32[1]{0}', space=sflag, size = 0x4, scoped, tag = 'scoped memory for tpu_custom_call.1']
    #allocation5 [shape = 'u8[4096]{0}', space=vmem, size = 0x1000, scoped, tag = 'output window, operand 0, single buffered']
    %10 = vsyncpa [#allocation3], 0
    %11 = vsyncpa [#allocation4], 0
    // Predicated region
    $region2: #{tpu_custom_call.1} parent=1 // pred_check
      _
    $region3: #{tpu_custom_call.1} parent=1 // pred_check_branch
      %13 = sbr.rel (0) target = $region5
    $region4: #{tpu_custom_call.1} parent=1 // pred_region
      _
    $region5: #{tpu_custom_call.1} parent=1 // pred_fallthru
      _
    // Predicated region
    $region6: #{tpu_custom_call.1} parent=1 // pred_check
      _
    $region7: #{tpu_custom_call.1} parent=1 // pred_check_branch
      %15 = sbr.rel (0) target = $region9
    $region8: #{tpu_custom_call.1} parent=1 // pred_region
      _
    $region9: #{tpu_custom_call.1} parent=1 // pred_fallthru
      _
    // Predicated region
    $region10: #{tpu_custom_call.1} parent=1 // pred_check
      _
    $region11: #{tpu_custom_call.1} parent=1 // pred_check_branch
      %17 = sbr.rel (0) target = $region13
    $region12: #{tpu_custom_call.1} parent=1 // pred_region
      _
    $region13: #{tpu_custom_call.1} parent=1 // pred_fallthru
      _
    // Predicated region
    $region14: #{tpu_custom_call.1} parent=1 // pred_check
      _
    $region15: #{tpu_custom_call.1} parent=1 // pred_check_branch
      %19 = sbr.rel (0) target = $region17
    $region16: #{tpu_custom_call.1} parent=1 // pred_region
      %s21 = ssub.s32 4096, 4096
      %22 = vsyncadd [#allocation3], %s21
      %s23 = sshll.u32 [#allocation2], 4
      %s24 = int_to_ptr.vmem [resolvable:$true] %s23
      %29 = dma.hbm_to_vmem [thread:$0]  %s3, 4096, %s24, [#allocation3], 128, 128, 8
    $region17: #{tpu_custom_call.1} parent=1 // pred_fallthru
      _
    // Predicated region
    $region18: #{tpu_custom_call.1} parent=1 // pred_check
      _
    $region19: #{tpu_custom_call.1} parent=1 // pred_check_branch
      %31 = sbr.rel (0) target = $region21
    $region20: #{tpu_custom_call.1} parent=1 // pred_region
      _
    $region21: #{tpu_custom_call.1} parent=1 // pred_fallthru
      _
    // Predicated region
    $region22: #{tpu_custom_call.1} parent=1 // pred_check
      _
    $region23: #{tpu_custom_call.1} parent=1 // pred_check_branch
      %33 = sbr.rel (0) target = $region25
    $region24: #{tpu_custom_call.1} parent=1 // pred_region
      %34 = dma.done [#allocation3], 4096
    $region25: #{tpu_custom_call.1} parent=1 // pred_fallthru
      _
    %v35 = vld [vmem:[%s0] sm:$0xff]
    %v36 = vld [vmem:[%s1] sm:$0xff]
    %v37 = vld [vmem:[%s2] sm:$0x3]
    %v39 = vlaneseq
    %v40 = vshrl.u32 %v39, 7
    %v41 = vsub.s32 0, %v40
    %v42 = vrot.slane %v37, %v41
    %v43 = vlaneseq
    %v44 = vshrl.u32 %v43, 7
    %v45 = vsub.s32 1, %v44
    %v46 = vrot.slane %v37, %v45
    %v50 = vcombine.high %v36, %v36
    %vm51 = vcmask 31744
    %v53 = vsel %vm51, %v35, 0
    %vm55 = vcmask 1043456
    %v56 = vsel %vm55, %v36, 0
    %v58 = vsel %vm55, %v50, 0
    %60 = vmatprep.subr.mxu0 %v58
    %61 = vmatpush1.msra.mxu0 %v56
    %62 = vmatprep.subr.mxu0 0.0
    %63 = vmatpush1.msra.mxu0 0.0
    %64 = vmatprep.subr.mxu0 0.0
    %65 = vmatpush1.msra.mxu0 0.0
    %66 = vmatprep.subr.mxu0 0.0
    %67 = vmatpush1.msra.mxu0 0.0
    %68 = vmatprep.subr.mxu0 0.0
    %69 = vmatpush1.msra.mxu0 0.0
    %70 = vmatprep.subr.mxu0 0.0
    %71 = vmatpush1.msra.mxu0 0.0
    %72 = vmatprep.subr.mxu0 0.0
    %73 = vmatpush1.msra.mxu0 0.0
    %74 = vmatprep.subr.mxu0 0.0
    %75 = vmatpush1.msra.mxu0 0.0
    %76 = vmatprep.subr.mxu0 0.0
    %77 = vmatpush1.msra.mxu0 0.0
    %78 = vmatprep.subr.mxu0 0.0
    %79 = vmatpush1.msra.mxu0 0.0
    %80 = vmatprep.subr.mxu0 0.0
    %81 = vmatpush1.msra.mxu0 0.0
    %82 = vmatprep.subr.mxu0 0.0
    %83 = vmatpush1.msra.mxu0 0.0
    %84 = vmatprep.subr.mxu0 0.0
    %85 = vmatpush1.msra.mxu0 0.0
    %86 = vmatprep.subr.mxu0 0.0
    %87 = vmatpush1.msra.mxu0 0.0
    %88 = vmatprep.subr.mxu0 0.0
    %89 = vmatpush1.msra.mxu0 0.0
    %90 = vmatprep.subr.mxu0 0.0
    %91 = vmatpush1.msra.mxu0 0.0
    %92 = vmatprep.subr.mxu0 0.0
    %93 = vmatpush1.msra.mxu0 0.0
    %94 = vmatprep.subr.mxu0 0.0
    %95 = vmatpush1.msra.mxu0 0.0
    %96 = vmatprep.subr.mxu0 0.0
    %97 = vmatpush1.msra.mxu0 0.0
    %98 = vmatprep.subr.mxu0 0.0
    %99 = vmatpush1.msra.mxu0 0.0
    %100 = vmatprep.subr.mxu0 0.0
    %101 = vmatpush1.msra.mxu0 0.0
    %102 = vmatprep.subr.mxu0 0.0
    %103 = vmatpush1.msra.mxu0 0.0
    %104 = vmatprep.subr.mxu0 0.0
    %105 = vmatpush1.msra.mxu0 0.0
    %106 = vmatprep.subr.mxu0 0.0
    %107 = vmatpush1.msra.mxu0 0.0
    %108 = vmatprep.subr.mxu0 0.0
    %109 = vmatpush1.msra.mxu0 0.0
    %110 = vmatprep.subr.mxu0 0.0
    %111 = vmatpush1.msra.mxu0 0.0
    %112 = vmatprep.subr.mxu0 0.0
    %113 = vmatpush1.msra.mxu0 0.0
    %114 = vmatprep.subr.mxu0 0.0
    %115 = vmatpush1.msra.mxu0 0.0
    %116 = vmatprep.subr.mxu0 0.0
    %117 = vmatpush1.msra.mxu0 0.0
    %118 = vmatprep.subr.mxu0 0.0
    %119 = vmatpush1.msra.mxu0 0.0
    %120 = vmatprep.subr.mxu0 0.0
    %121 = vmatpush1.msra.mxu0 0.0
    %122 = vmatprep.subr.mxu0 0.0
    %123 = vmatpush1.msra.mxu0 0.0
    %124 = vmatprep.mubr.f32.mxu0 0.0
    %125 = vmatmul.mubr.f32.gmra.mrb[0].mxu0 %v53
    %v126 = vpop.f32.mrb[0].mxu0
    %v127 = vadd.f32 %v42, %v126
    %v128 = vpop.f32.mrb[0].mxu0
    %v129 = vadd.f32 %v46, %v128
    %130 = vdwg.mxu0
    %v131 = vmax.f32 %v127, 0.0
    %v132 = vmax.f32 %v129, 0.0
    %v133 = vld [vmem:[#allocation2] sm:$0xff]
    %v134 = vld [vmem:[#allocation2 + $0x8] sm:$0xff]
    %v135 = vld [vmem:[#allocation2 + $0x10] sm:$0xff]
    %v136 = vld [vmem:[#allocation2 + $0x18] sm:$0xff]
    %v137 = vld [vmem:[#allocation2 + $0x20] sm:$0xff]
    %v138 = vld [vmem:[#allocation2 + $0x28] sm:$0xff]
    %v139 = vld [vmem:[#allocation2 + $0x30] sm:$0xff]
    %v140 = vld [vmem:[#allocation2 + $0x38] sm:$0xff]
    %v141 = vld [vmem:[#allocation2 + $0x40] sm:$0xff]
    %v142 = vld [vmem:[#allocation2 + $0x48] sm:$0xff]
    %v143 = vld [vmem:[#allocation2 + $0x50] sm:$0xff]
    %v144 = vld [vmem:[#allocation2 + $0x58] sm:$0xff]
    %v145 = vld [vmem:[#allocation2 + $0x60] sm:$0xff]
    %v146 = vld [vmem:[#allocation2 + $0x68] sm:$0xff]
    %v147 = vld [vmem:[#allocation2 + $0x70] sm:$0xff]
    %v148 = vld [vmem:[#allocation2 + $0x78] sm:$0xff]
    %v149 = vld [vmem:[#allocation2 + $0x80] sm:$0xff]
    %v150 = vld [vmem:[#allocation2 + $0x88] sm:$0xff]
    %v151 = vld [vmem:[#allocation2 + $0x90] sm:$0xff]
    %v152 = vld [vmem:[#allocation2 + $0x98] sm:$0xff]
    %v153 = vld [vmem:[#allocation2 + $0xa0] sm:$0xff]
    %v154 = vld [vmem:[#allocation2 + $0xa8] sm:$0xff]
    %v155 = vld [vmem:[#allocation2 + $0xb0] sm:$0xff]
    %v156 = vld [vmem:[#allocation2 + $0xb8] sm:$0xff]
    %v157 = vld [vmem:[#allocation2 + $0xc0] sm:$0xff]
    %v158 = vld [vmem:[#allocation2 + $0xc8] sm:$0xff]
    %v159 = vld [vmem:[#allocation2 + $0xd0] sm:$0xff]
    %v160 = vld [vmem:[#allocation2 + $0xd8] sm:$0xff]
    %v161 = vld [vmem:[#allocation2 + $0xe0] sm:$0xff]
    %v162 = vld [vmem:[#allocation2 + $0xe8] sm:$0xff]
    %v163 = vld [vmem:[#allocation2 + $0xf0] sm:$0xff]
    %v164 = vld [vmem:[#allocation2 + $0xf8] sm:$0xff]
    %v165 = vld [vmem:[%s4] sm:$0x1]
    %v167 = vlaneseq
    %v168 = vshrl.u32 %v167, 7
    %v169 = vsub.s32 0, %v168
    %v170 = vrot.slane %v165, %v169
    %172 = vmatprep.subr.mxu0 0.0
    %173 = vmatpush1.msra.mxu0 %v133
    %174 = vmatprep.subr.mxu0 0.0
    %175 = vmatpush1.msra.mxu0 %v134
    %176 = vmatprep.subr.mxu0 0.0
    %177 = vmatpush1.msra.mxu0 %v135
    %178 = vmatprep.subr.mxu0 0.0
    %179 = vmatpush1.msra.mxu0 %v136
    %180 = vmatprep.subr.mxu0 0.0
    %181 = vmatpush1.msra.mxu0 %v137
    %182 = vmatprep.subr.mxu0 0.0
    %183 = vmatpush1.msra.mxu0 %v138
    %184 = vmatprep.subr.mxu0 0.0
    %185 = vmatpush1.msra.mxu0 %v139
    %186 = vmatprep.subr.mxu0 0.0
    %187 = vmatpush1.msra.mxu0 %v140
    %188 = vmatprep.subr.mxu0 0.0
    %189 = vmatpush1.msra.mxu0 %v141
    %190 = vmatprep.subr.mxu0 0.0
    %191 = vmatpush1.msra.mxu0 %v142
    %192 = vmatprep.subr.mxu0 0.0
    %193 = vmatpush1.msra.mxu0 %v143
    %194 = vmatprep.subr.mxu0 0.0
    %195 = vmatpush1.msra.mxu0 %v144
    %196 = vmatprep.subr.mxu0 0.0
    %197 = vmatpush1.msra.mxu0 %v145
    %198 = vmatprep.subr.mxu0 0.0
    %199 = vmatpush1.msra.mxu0 %v146
    %200 = vmatprep.subr.mxu0 0.0
    %201 = vmatpush1.msra.mxu0 %v147
    %202 = vmatprep.subr.mxu0 0.0
    %203 = vmatpush1.msra.mxu0 %v148
    %204 = vmatprep.subr.mxu0 0.0
    %205 = vmatpush1.msra.mxu0 %v149
    %206 = vmatprep.subr.mxu0 0.0
    %207 = vmatpush1.msra.mxu0 %v150
    %208 = vmatprep.subr.mxu0 0.0
    %209 = vmatpush1.msra.mxu0 %v151
    %210 = vmatprep.subr.mxu0 0.0
    %211 = vmatpush1.msra.mxu0 %v152
    %212 = vmatprep.subr.mxu0 0.0
    %213 = vmatpush1.msra.mxu0 %v153
    %214 = vmatprep.subr.mxu0 0.0
    %215 = vmatpush1.msra.mxu0 %v154
    %216 = vmatprep.subr.mxu0 0.0
    %217 = vmatpush1.msra.mxu0 %v155
    %218 = vmatprep.subr.mxu0 0.0
    %219 = vmatpush1.msra.mxu0 %v156
    %220 = vmatprep.subr.mxu0 0.0
    %221 = vmatpush1.msra.mxu0 %v157
    %222 = vmatprep.subr.mxu0 0.0
    %223 = vmatpush1.msra.mxu0 %v158
    %224 = vmatprep.subr.mxu0 0.0
    %225 = vmatpush1.msra.mxu0 %v159
    %226 = vmatprep.subr.mxu0 0.0
    %227 = vmatpush1.msra.mxu0 %v160
    %228 = vmatprep.subr.mxu0 0.0
    %229 = vmatpush1.msra.mxu0 %v161
    %230 = vmatprep.subr.mxu0 0.0
    %231 = vmatpush1.msra.mxu0 %v162
    %232 = vmatprep.subr.mxu0 0.0
    %233 = vmatpush1.msra.mxu0 %v163
    %234 = vmatprep.subr.mxu0 0.0
    %235 = vmatpush1.msra.mxu0 %v164
    %236 = vmatprep.mubr.f32.mxu0 %v132
    %237 = vmatmul.mubr.f32.gmra.mrb[0].mxu0 %v131
    %v238 = vpop.f32.mrb[0].mxu0
    %v239 = vadd.f32 %v170, %v238
    %v240 = vpop.f32.mrb[0].mxu0
    %241 = vdwg.mxu0
    %242 = vst [vmem:[#allocation5] sm:$0xff] %v239
    // Predicated region
    $region26: #{tpu_custom_call.1} parent=1 // pred_check
      _
    $region27: #{tpu_custom_call.1} parent=1 // pred_check_branch
      %244 = sbr.rel (0) target = $region29
    $region28: #{tpu_custom_call.1} parent=1 // pred_region
      %s246 = ssub.s32 128, 128
      %247 = vsyncadd [#allocation4], %s246
      %s249 = sshll.u32 [#allocation5], 4
      %s250 = int_to_ptr.vmem [resolvable:$true] %s249
      %252 = dma.vmem_to_hbm [thread:$0]  %s250, 128, %s5, [#allocation4]
    $region29: #{tpu_custom_call.1} parent=1 // pred_fallthru
      _
    // Predicated region
    $region30: #{tpu_custom_call.1} parent=1 // pred_check
      _
    $region31: #{tpu_custom_call.1} parent=1 // pred_check_branch
      %254 = sbr.rel (0) target = $region33
    $region32: #{tpu_custom_call.1} parent=1 // pred_region
      %255 = dma.done [#allocation4], 128
    $region33: #{tpu_custom_call.1} parent=1 // pred_fallthru
      _
    %256 = vsyncpa [#allocation3], 1
    %257 = vsyncpa [#allocation4], 1

</llo_original>
